<compile_context>
chip_gen: v7x
topology: tpu7x:2x2x1
jax: 0.10.0
libtpu: 0.0.40
codegen_flags: <defaults>
</compile_context>

<pallas_src>
import jax
import jax.numpy as jnp
from jax import lax
from jax.experimental import pallas as pl
from jax.experimental.pallas import tpu as pltpu

IN_FEATS = 92          # raw input features
LABEL_FEATS = 3        # (_sum, x_mean, x_std)
HIDDEN = 32            # hidden_size
DROP_P = 0.5


def _round_up(n, m):
    return ((n + m - 1) // m) * m


def _elu(v):
    # ELU(alpha=1): v if v > 0 else exp(v) - 1 (clamp exp arg so the unselected branch is finite)
    return jnp.where(v > 0.0, v, jnp.exp(jnp.minimum(v, 0.0)) - 1.0)


def disc_kernel(x_ref, mask_ref, wts_ref,
                w1x_ref, w1s_ref, w1m_ref, w1d_ref, b1_ref,
                drop_ref, w2_ref, b2_ref, w3_ref, b3_ref,
                o_ref):
    x = x_ref[...]                                   # (TB, 92) f32
    mask = mask_ref[...]                             # (1, 92)  1.0 for cols 1..90 else 0.0
    wts = wts_ref[...]                               # (1, 92)  masked weights arange(0.5, 3.5, 3/90)

    # ---------------- cal_label ----------------
    xm = x * mask
    _sum = jnp.sum(xm, axis=-1, keepdims=True)                       # (TB, 1)
    xtmp = x * wts                                                   # (TB, 92), zero outside 1..90
    x_mean = jnp.sum(xtmp, axis=-1, keepdims=True) / _sum            # (TB, 1)
    dev = xtmp - x_mean * mask
    x_std = jnp.sqrt(jnp.sum(dev * dev, axis=-1, keepdims=True)) / _sum   # (TB, 1)

    # ---------------- map1 + ELU ----------------
    # cat((x, label), -1) @ W1 split into x @ W1[:92] + sum_k label_k * W1[92+k]
    h = jnp.dot(x, w1x_ref[...], preferred_element_type=jnp.float32)      # (TB, H)
    h = h + _sum * w1s_ref[...] + x_mean * w1m_ref[...] + x_std * w1d_ref[...]
    h = _elu(h + b1_ref[...])

    # ---------------- dropout(p=0.5), inverted scaling ----------------
    # drop_ref holds keep_mask * 1/(1-p), precomputed host-side.
    h = h * drop_ref[...]

    # ---------------- map2 + ELU ----------------
    h2 = _elu(jnp.dot(h, w2_ref[...], preferred_element_type=jnp.float32) + b2_ref[...])

    # ---------------- map3 + sigmoid (lane-dense (1, TB) output) ----------------
    # (1, H) contracted against (TB, H) on H -> (1, TB); batch ends up on lanes.
    logit = lax.dot_general(w3_ref[...], h2,
                            dimension_numbers=(((1,), (1,)), ((), ())),
                            preferred_element_type=jnp.float32)           # (1, TB)
    logit = logit + b3_ref[...]
    o_ref[...] = (1.0 / (1.0 + jnp.exp(-logit))).reshape(o_ref.shape)     # (1, 1, TB)


def discriminator_forward(x, params, dropout_key, *, tile_b=1024):
    B, F = x.shape
    assert F == IN_FEATS
    H = params["w1"].shape[1]

    # Pick a batch tile: large (to amortize per-step overhead) but no bigger than the
    # (8-rounded) batch. Pad the batch up to a multiple of the tile.
    tile_b = min(tile_b, _round_up(B, 8))
    B_pad = _round_up(B, tile_b)
    num_tiles = B_pad // tile_b
    if B_pad != B:
        # Pad with 1.0 so padded rows stay finite (they are sliced off below).
        x = jnp.concatenate([x, jnp.ones((B_pad - B, F), x.dtype)], axis=0)

    # ---- cal_label constants, hoisted out of the kernel ----
    cols = jnp.arange(IN_FEATS, dtype=jnp.float32)
    col_mask = jnp.logical_and(cols >= 1.0, cols <= 90.0).astype(jnp.float32)
    col_wts = (0.5 + (cols - 1.0) * (3.0 / 90.0)) * col_mask
    col_mask = col_mask[None, :]                       # (1, 92)
    col_wts = col_wts[None, :]                         # (1, 92)

    # ---- pre-split w1: feature rows + three label rows (no in-kernel unaligned slices) ----
    w1 = params["w1"]                                  # (95, H)
    w1x = w1[0:IN_FEATS]                               # (92, H)
    w1s = w1[IN_FEATS + 0:IN_FEATS + 1]                # (1, H)  row for _sum
    w1m = w1[IN_FEATS + 1:IN_FEATS + 2]                # (1, H)  row for x_mean
    w1d = w1[IN_FEATS + 2:IN_FEATS + 3]                # (1, H)  row for x_std

    # ---- dropout keep mask, pre-scaled by 1/(1-p) ----
    keep = jax.random.bernoulli(dropout_key, 1.0 - DROP_P, (B_pad, H))
    drop = keep.astype(jnp.float32) * (1.0 / (1.0 - DROP_P))

    grid_spec = pltpu.PrefetchScalarGridSpec(
        num_scalar_prefetch=0,
        grid=(num_tiles,),
        in_specs=[
            pl.BlockSpec((tile_b, IN_FEATS), lambda i: (i, 0)),   # x
            pl.BlockSpec((1, IN_FEATS), lambda i: (0, 0)),        # column mask
            pl.BlockSpec((1, IN_FEATS), lambda i: (0, 0)),        # column weights
            pl.BlockSpec((IN_FEATS, H), lambda i: (0, 0)),        # w1 (feature rows)
            pl.BlockSpec((1, H), lambda i: (0, 0)),               # w1 row for _sum
            pl.BlockSpec((1, H), lambda i: (0, 0)),               # w1 row for x_mean
            pl.BlockSpec((1, H), lambda i: (0, 0)),               # w1 row for x_std
            pl.BlockSpec((1, H), lambda i: (0, 0)),               # b1
            pl.BlockSpec((tile_b, H), lambda i: (i, 0)),          # dropout mask (scaled)
            pl.BlockSpec((H, H), lambda i: (0, 0)),               # w2
            pl.BlockSpec((1, H), lambda i: (0, 0)),               # b2
            pl.BlockSpec((1, H), lambda i: (0, 0)),               # w3 (as a row)
            pl.BlockSpec((1, 1), lambda i: (0, 0)),               # b3
        ],
        out_specs=pl.BlockSpec((1, 1, tile_b), lambda i: (i, 0, 0)),
    )

    out = pl.pallas_call(
        disc_kernel,
        out_shape=jax.ShapeDtypeStruct((num_tiles, 1, tile_b), jnp.float32),
        grid_spec=grid_spec,
        compiler_params=pltpu.CompilerParams(dimension_semantics=("parallel",)),
    )(x, col_mask, col_wts, w1x, w1s, w1m, w1d, params["b1"],
      drop, params["w2"], params["b2"], params["w3"].reshape(1, H), params["b3"])

    return out.reshape(B_pad, 1)[:B]


def init_params(key, hidden):
    # Deterministic init mimicking nn.Linear default U(-1/sqrt(fan_in), 1/sqrt(fan_in)).
    ks = jax.random.split(key, 6)

    def lin(kw, kb, fan_in, fan_out):
        bound = 1.0 / jnp.sqrt(fan_in)
        w = jax.random.uniform(kw, (fan_in, fan_out), jnp.float32, -bound, bound)
        b = jax.random.uniform(kb, (1, fan_out), jnp.float32, -bound, bound)
        return w, b

    w1, b1 = lin(ks[0], ks[1], IN_FEATS + LABEL_FEATS, hidden)
    w2, b2 = lin(ks[2], ks[3], hidden, hidden)
    w3, b3 = lin(ks[4], ks[5], hidden, 1)
    return {"w1": w1, "b1": b1, "w2": w2, "b2": b2, "w3": w3, "b3": b3}


if __name__ == "__main__":
    key = jax.random.PRNGKey(0)
    kx, kp, kd = jax.random.split(key, 3)

    B = 16
    # Positive inputs so that _sum > 0 (histogram-like input the model expects).
    x = jax.random.uniform(kx, (B, IN_FEATS), jnp.float32, 0.1, 1.0)
    params = init_params(kp, HIDDEN)

    out = discriminator_forward(x, params, kd)
    out = jax.block_until_ready(out)

    assert out.shape == (B, 1)
    assert bool(jnp.all(jnp.isfinite(out)))
    assert bool(jnp.all((out > 0.0) & (out < 1.0)))
    print("KERNEL_OK")
</pallas_src>

<mosaic_0001>
module attributes {stable_mosaic.version = 11 : i64} {
  func.func @disc_kernel(%arg0: i32, %arg1: memref<16x92xf32, #tpu.memory_space<vmem>>, %arg2: memref<1x92xf32, #tpu.memory_space<vmem>>, %arg3: memref<1x92xf32, #tpu.memory_space<vmem>>, %arg4: memref<92x32xf32, #tpu.memory_space<vmem>>, %arg5: memref<1x32xf32, #tpu.memory_space<vmem>>, %arg6: memref<1x32xf32, #tpu.memory_space<vmem>>, %arg7: memref<1x32xf32, #tpu.memory_space<vmem>>, %arg8: memref<1x32xf32, #tpu.memory_space<vmem>>, %arg9: memref<16x32xf32, #tpu.memory_space<vmem>>, %arg10: memref<32x32xf32, #tpu.memory_space<vmem>>, %arg11: memref<1x32xf32, #tpu.memory_space<vmem>>, %arg12: memref<1x32xf32, #tpu.memory_space<vmem>>, %arg13: memref<1x1xf32, #tpu.memory_space<vmem>>, %arg14: memref<1x1x16xf32, #tpu.memory_space<vmem>>) attributes {dimension_semantics = [#tpu.dimension_semantics<parallel>], iteration_bounds = array<i64: 1>, scalar_prefetch = 0 : i64, scratch_operands = 0 : i64, tpu.core_type = #tpu.core_type<tc>, window_params = [{transform_indices = @transform_0, window_bounds = array<i64: 16, 92>}, {pipeline_mode = #tpu.pipeline_mode<synchronous>, transform_indices = @transform_1, window_bounds = array<i64: 1, 92>}, {pipeline_mode = #tpu.pipeline_mode<synchronous>, transform_indices = @transform_2, window_bounds = array<i64: 1, 92>}, {pipeline_mode = #tpu.pipeline_mode<synchronous>, transform_indices = @transform_3, window_bounds = array<i64: 92, 32>}, {pipeline_mode = #tpu.pipeline_mode<synchronous>, transform_indices = @transform_4, window_bounds = array<i64: 1, 32>}, {pipeline_mode = #tpu.pipeline_mode<synchronous>, transform_indices = @transform_5, window_bounds = array<i64: 1, 32>}, {pipeline_mode = #tpu.pipeline_mode<synchronous>, transform_indices = @transform_6, window_bounds = array<i64: 1, 32>}, {pipeline_mode = #tpu.pipeline_mode<synchronous>, transform_indices = @transform_7, window_bounds = array<i64: 1, 32>}, {transform_indices = @transform_8, window_bounds = array<i64: 16, 32>}, {pipeline_mode = #tpu.pipeline_mode<synchronous>, transform_indices = @transform_9, window_bounds = array<i64: 32, 32>}, {pipeline_mode = #tpu.pipeline_mode<synchronous>, transform_indices = @transform_10, window_bounds = array<i64: 1, 32>}, {pipeline_mode = #tpu.pipeline_mode<synchronous>, transform_indices = @transform_11, window_bounds = array<i64: 1, 32>}, {pipeline_mode = #tpu.pipeline_mode<synchronous>, transform_indices = @transform_12, window_bounds = array<i64: 1, 1>}, {transform_indices = @transform_13, window_bounds = array<i64: 1, 1, 16>}]} {
    %c0 = arith.constant 0 : index
    %c0_0 = arith.constant 0 : index
    %0 = vector.load %arg1[%c0, %c0_0] : memref<16x92xf32, #tpu.memory_space<vmem>>, vector<16x92xf32>
    %c0_1 = arith.constant 0 : index
    %c0_2 = arith.constant 0 : index
    %1 = vector.load %arg2[%c0_1, %c0_2] : memref<1x92xf32, #tpu.memory_space<vmem>>, vector<1x92xf32>
    %c0_3 = arith.constant 0 : index
    %c0_4 = arith.constant 0 : index
    %2 = vector.load %arg3[%c0_3, %c0_4] : memref<1x92xf32, #tpu.memory_space<vmem>>, vector<1x92xf32>
    %3 = vector.broadcast %1 : vector<1x92xf32> to vector<16x92xf32>
    %4 = arith.mulf %0, %3 : vector<16x92xf32>
    %cst = arith.constant dense<0.000000e+00> : vector<16xf32>
    %5 = vector.multi_reduction <add>, %4, %cst [1] : vector<16x92xf32> to vector<16xf32>
    %6 = vector.shape_cast %5 : vector<16xf32> to vector<16x1xf32>
    %7 = vector.broadcast %2 : vector<1x92xf32> to vector<16x92xf32>
    %8 = arith.mulf %0, %7 : vector<16x92xf32>
    %cst_5 = arith.constant dense<0.000000e+00> : vector<16xf32>
    %9 = vector.multi_reduction <add>, %8, %cst_5 [1] : vector<16x92xf32> to vector<16xf32>
    %10 = vector.shape_cast %9 : vector<16xf32> to vector<16x1xf32>
    %11 = arith.divf %10, %6 : vector<16x1xf32>
    %12 = vector.broadcast %11 : vector<16x1xf32> to vector<16x92xf32>
    %13 = vector.broadcast %1 : vector<1x92xf32> to vector<16x92xf32>
    %14 = arith.mulf %12, %13 : vector<16x92xf32>
    %15 = arith.subf %8, %14 : vector<16x92xf32>
    %16 = arith.mulf %15, %15 : vector<16x92xf32>
    %cst_6 = arith.constant dense<0.000000e+00> : vector<16xf32>
    %17 = vector.multi_reduction <add>, %16, %cst_6 [1] : vector<16x92xf32> to vector<16xf32>
    %18 = vector.shape_cast %17 : vector<16xf32> to vector<16x1xf32>
    %19 = math.sqrt %18 : vector<16x1xf32>
    %20 = arith.divf %19, %6 : vector<16x1xf32>
    %c0_7 = arith.constant 0 : index
    %c0_8 = arith.constant 0 : index
    %21 = vector.load %arg4[%c0_7, %c0_8] : memref<92x32xf32, #tpu.memory_space<vmem>>, vector<92x32xf32>
    %cst_9 = arith.constant dense<0.000000e+00> : vector<16x32xf32>
    %22 = tpu.matmul %0, %21, %cst_9 {dimension_numbers = #tpu.dot_dimension_numbers<[1], [0], [0], [1], [0, 0, 1, 1], [], []>} : vector<16x92xf32>, vector<92x32xf32>, vector<16x32xf32> -> vector<16x32xf32>
    %c0_10 = arith.constant 0 : index
    %c0_11 = arith.constant 0 : index
    %23 = vector.load %arg5[%c0_10, %c0_11] : memref<1x32xf32, #tpu.memory_space<vmem>>, vector<1x32xf32>
    %24 = vector.broadcast %6 : vector<16x1xf32> to vector<16x32xf32>
    %25 = vector.broadcast %23 : vector<1x32xf32> to vector<16x32xf32>
    %26 = arith.mulf %24, %25 : vector<16x32xf32>
    %27 = arith.addf %22, %26 : vector<16x32xf32>
    %c0_12 = arith.constant 0 : index
    %c0_13 = arith.constant 0 : index
    %28 = vector.load %arg6[%c0_12, %c0_13] : memref<1x32xf32, #tpu.memory_space<vmem>>, vector<1x32xf32>
    %29 = vector.broadcast %11 : vector<16x1xf32> to vector<16x32xf32>
    %30 = vector.broadcast %28 : vector<1x32xf32> to vector<16x32xf32>
    %31 = arith.mulf %29, %30 : vector<16x32xf32>
    %32 = arith.addf %27, %31 : vector<16x32xf32>
    %c0_14 = arith.constant 0 : index
    %c0_15 = arith.constant 0 : index
    %33 = vector.load %arg7[%c0_14, %c0_15] : memref<1x32xf32, #tpu.memory_space<vmem>>, vector<1x32xf32>
    %34 = vector.broadcast %20 : vector<16x1xf32> to vector<16x32xf32>
    %35 = vector.broadcast %33 : vector<1x32xf32> to vector<16x32xf32>
    %36 = arith.mulf %34, %35 : vector<16x32xf32>
    %37 = arith.addf %32, %36 : vector<16x32xf32>
    %c0_16 = arith.constant 0 : index
    %c0_17 = arith.constant 0 : index
    %38 = vector.load %arg8[%c0_16, %c0_17] : memref<1x32xf32, #tpu.memory_space<vmem>>, vector<1x32xf32>
    %39 = vector.broadcast %38 : vector<1x32xf32> to vector<16x32xf32>
    %40 = arith.addf %37, %39 : vector<16x32xf32>
    %cst_18 = arith.constant 0.000000e+00 : f32
    %41 = vector.broadcast %cst_18 : f32 to vector<16x32xf32>
    %42 = arith.cmpf ogt, %40, %41 : vector<16x32xf32>
    %cst_19 = arith.constant 0.000000e+00 : f32
    %43 = vector.broadcast %cst_19 : f32 to vector<16x32xf32>
    %44 = arith.minimumf %40, %43 : vector<16x32xf32>
    %45 = math.exp %44 : vector<16x32xf32>
    %cst_20 = arith.constant 1.000000e+00 : f32
    %46 = vector.broadcast %cst_20 : f32 to vector<16x32xf32>
    %47 = arith.subf %45, %46 : vector<16x32xf32>
    %48 = arith.select %42, %40, %47 : vector<16x32xi1>, vector<16x32xf32>
    %c0_21 = arith.constant 0 : index
    %c0_22 = arith.constant 0 : index
    %49 = vector.load %arg9[%c0_21, %c0_22] : memref<16x32xf32, #tpu.memory_space<vmem>>, vector<16x32xf32>
    %50 = arith.mulf %48, %49 : vector<16x32xf32>
    %c0_23 = arith.constant 0 : index
    %c0_24 = arith.constant 0 : index
    %51 = vector.load %arg10[%c0_23, %c0_24] : memref<32x32xf32, #tpu.memory_space<vmem>>, vector<32x32xf32>
    %cst_25 = arith.constant dense<0.000000e+00> : vector<16x32xf32>
    %52 = tpu.matmul %50, %51, %cst_25 {dimension_numbers = #tpu.dot_dimension_numbers<[1], [0], [0], [1], [0, 0, 1, 1], [], []>} : vector<16x32xf32>, vector<32x32xf32>, vector<16x32xf32> -> vector<16x32xf32>
    %c0_26 = arith.constant 0 : index
    %c0_27 = arith.constant 0 : index
    %53 = vector.load %arg11[%c0_26, %c0_27] : memref<1x32xf32, #tpu.memory_space<vmem>>, vector<1x32xf32>
    %54 = vector.broadcast %53 : vector<1x32xf32> to vector<16x32xf32>
    %55 = arith.addf %52, %54 : vector<16x32xf32>
    %cst_28 = arith.constant 0.000000e+00 : f32
    %56 = vector.broadcast %cst_28 : f32 to vector<16x32xf32>
    %57 = arith.cmpf ogt, %55, %56 : vector<16x32xf32>
    %cst_29 = arith.constant 0.000000e+00 : f32
    %58 = vector.broadcast %cst_29 : f32 to vector<16x32xf32>
    %59 = arith.minimumf %55, %58 : vector<16x32xf32>
    %60 = math.exp %59 : vector<16x32xf32>
    %cst_30 = arith.constant 1.000000e+00 : f32
    %61 = vector.broadcast %cst_30 : f32 to vector<16x32xf32>
    %62 = arith.subf %60, %61 : vector<16x32xf32>
    %63 = arith.select %57, %55, %62 : vector<16x32xi1>, vector<16x32xf32>
    %c0_31 = arith.constant 0 : index
    %c0_32 = arith.constant 0 : index
    %64 = vector.load %arg12[%c0_31, %c0_32] : memref<1x32xf32, #tpu.memory_space<vmem>>, vector<1x32xf32>
    %cst_33 = arith.constant dense<0.000000e+00> : vector<1x16xf32>
    %65 = tpu.matmul %64, %63, %cst_33 {dimension_numbers = #tpu.dot_dimension_numbers<[1], [1], [0], [0], [0, 0, 1, 0], [], []>} : vector<1x32xf32>, vector<16x32xf32>, vector<1x16xf32> -> vector<1x16xf32>
    %c0_34 = arith.constant 0 : index
    %c0_35 = arith.constant 0 : index
    %66 = vector.load %arg13[%c0_34, %c0_35] : memref<1x1xf32, #tpu.memory_space<vmem>>, vector<1x1xf32>
    %67 = vector.broadcast %66 : vector<1x1xf32> to vector<1x16xf32>
    %68 = arith.addf %65, %67 : vector<1x16xf32>
    %cst_36 = arith.constant 0.000000e+00 : f32
    %69 = vector.broadcast %cst_36 : f32 to vector<1x16xf32>
    %70 = arith.subf %69, %68 : vector<1x16xf32>
    %71 = math.exp %70 : vector<1x16xf32>
    %cst_37 = arith.constant 1.000000e+00 : f32
    %72 = vector.broadcast %cst_37 : f32 to vector<1x16xf32>
    %73 = arith.addf %72, %71 : vector<1x16xf32>
    %cst_38 = arith.constant 1.000000e+00 : f32
    %74 = vector.broadcast %cst_38 : f32 to vector<1x16xf32>
    %75 = arith.divf %74, %73 : vector<1x16xf32>
    %76 = vector.shape_cast %75 : vector<1x16xf32> to vector<1x1x16xf32>
    %c0_39 = arith.constant 0 : index
    %c0_40 = arith.constant 0 : index
    %c0_41 = arith.constant 0 : index
    %77 = vector.load %arg14[%c0_39, %c0_40, %c0_41] : memref<1x1x16xf32, #tpu.memory_space<vmem>>, vector<1x1x16xf32>
    tpu.vector_store %arg14[%c0_39, %c0_40, %c0_41], %76 {strides = array<i32>} : memref<1x1x16xf32, #tpu.memory_space<vmem>>, vector<1x1x16xf32>,
    return
  }
  func.func @transform_0(%arg0: i32) -> (i32, i32) {
    %c0_i32 = arith.constant 0 : i32
    %c0_i32_0 = arith.constant 0 : i32
    return %arg0, %c0_i32 : i32, i32
  }
  func.func @transform_1(%arg0: i32) -> (i32, i32) {
    %c0_i32 = arith.constant 0 : i32
    %c0_i32_0 = arith.constant 0 : i32
    %c0_i32_1 = arith.constant 0 : i32
    return %c0_i32, %c0_i32_0 : i32, i32
  }
  func.func @transform_2(%arg0: i32) -> (i32, i32) {
    %c0_i32 = arith.constant 0 : i32
    %c0_i32_0 = arith.constant 0 : i32
    %c0_i32_1 = arith.constant 0 : i32
    return %c0_i32, %c0_i32_0 : i32, i32
  }
  func.func @transform_3(%arg0: i32) -> (i32, i32) {
    %c0_i32 = arith.constant 0 : i32
    %c0_i32_0 = arith.constant 0 : i32
    %c0_i32_1 = arith.constant 0 : i32
    return %c0_i32, %c0_i32_0 : i32, i32
  }
  func.func @transform_4(%arg0: i32) -> (i32, i32) {
    %c0_i32 = arith.constant 0 : i32
    %c0_i32_0 = arith.constant 0 : i32
    %c0_i32_1 = arith.constant 0 : i32
    return %c0_i32, %c0_i32_0 : i32, i32
  }
  func.func @transform_5(%arg0: i32) -> (i32, i32) {
    %c0_i32 = arith.constant 0 : i32
    %c0_i32_0 = arith.constant 0 : i32
    %c0_i32_1 = arith.constant 0 : i32
    return %c0_i32, %c0_i32_0 : i32, i32
  }
  func.func @transform_6(%arg0: i32) -> (i32, i32) {
    %c0_i32 = arith.constant 0 : i32
    %c0_i32_0 = arith.constant 0 : i32
    %c0_i32_1 = arith.constant 0 : i32
    return %c0_i32, %c0_i32_0 : i32, i32
  }
  func.func @transform_7(%arg0: i32) -> (i32, i32) {
    %c0_i32 = arith.constant 0 : i32
    %c0_i32_0 = arith.constant 0 : i32
    %c0_i32_1 = arith.constant 0 : i32
    return %c0_i32, %c0_i32_0 : i32, i32
  }
  func.func @transform_8(%arg0: i32) -> (i32, i32) {
    %c0_i32 = arith.constant 0 : i32
    %c0_i32_0 = arith.constant 0 : i32
    return %arg0, %c0_i32 : i32, i32
  }
  func.func @transform_9(%arg0: i32) -> (i32, i32) {
    %c0_i32 = arith.constant 0 : i32
    %c0_i32_0 = arith.constant 0 : i32
    %c0_i32_1 = arith.constant 0 : i32
    return %c0_i32, %c0_i32_0 : i32, i32
  }
  func.func @transform_10(%arg0: i32) -> (i32, i32) {
    %c0_i32 = arith.constant 0 : i32
    %c0_i32_0 = arith.constant 0 : i32
    %c0_i32_1 = arith.constant 0 : i32
    return %c0_i32, %c0_i32_0 : i32, i32
  }
  func.func @transform_11(%arg0: i32) -> (i32, i32) {
    %c0_i32 = arith.constant 0 : i32
    %c0_i32_0 = arith.constant 0 : i32
    %c0_i32_1 = arith.constant 0 : i32
    return %c0_i32, %c0_i32_0 : i32, i32
  }
  func.func @transform_12(%arg0: i32) -> (i32, i32) {
    %c0_i32 = arith.constant 0 : i32
    %c0_i32_0 = arith.constant 0 : i32
    %c0_i32_1 = arith.constant 0 : i32
    return %c0_i32, %c0_i32_0 : i32, i32
  }
  func.func @transform_13(%arg0: i32) -> (i32, i32, i32) {
    %c0_i32 = arith.constant 0 : i32
    %c0_i32_0 = arith.constant 0 : i32
    %c0_i32_1 = arith.constant 0 : i32
    return %arg0, %c0_i32, %c0_i32_0 : i32, i32, i32
  }
}

</mosaic_0001>

<llo_original>
// kernel: tpu_custom_call.1
$region0: #{tpu_custom_call.1}
  #allocation0 [shape = 'u32[]', space=smem, size = 0x4, offset = 0x4, fixed_abs, tag = 'smem constant byte address 0x4 - core index']
  #allocation1 [shape = 'u32[144,128]{1,0:T(1,128)}', space=vmem, size = 0x12000, scoped, tag = 'internal scratch']
  #allocation2 [shape = 'f32[1,1]{1,0:T(1,128)S(1)}', space=vmem, size = 0x200, scoped, tag = 'scoped memory for tpu_custom_call.1']
  %s0 = inlined_call_operand.vmem [shape: f32[16,92], index: 0, kind: input, shape index: {}]
  %s1 = inlined_call_operand.vmem [shape: f32[1,92], index: 1, kind: input, shape index: {}]
  %s2 = inlined_call_operand.vmem [shape: f32[1,92], index: 2, kind: input, shape index: {}]
  %s3 = inlined_call_operand.vmem [shape: f32[92,32], index: 3, kind: input, shape index: {}]
  %s4 = inlined_call_operand.vmem [shape: f32[1,32], index: 4, kind: input, shape index: {}]
  %s5 = inlined_call_operand.vmem [shape: f32[1,32], index: 5, kind: input, shape index: {}]
  %s6 = inlined_call_operand.vmem [shape: f32[1,32], index: 6, kind: input, shape index: {}]
  %s7 = inlined_call_operand.vmem [shape: f32[1,32], index: 7, kind: input, shape index: {}]
  %s8 = inlined_call_operand.vmem [shape: f32[16,32], index: 8, kind: input, shape index: {}]
  %s9 = inlined_call_operand.vmem [shape: f32[32,32], index: 9, kind: input, shape index: {}]
  %s10 = inlined_call_operand.vmem [shape: f32[1,32], index: 10, kind: input, shape index: {}]
  %s11 = inlined_call_operand.vmem [shape: f32[1,32], index: 11, kind: input, shape index: {}]
  %s12 = inlined_call_operand.<no memory space> [shape: f32[1,1], index: 12, kind: input, shape index: {}]
  %s13 = inlined_call_operand.hbm [shape: f32[1,1,16], index: 13, kind: output, shape index: {}]
  %s14 = sld [smem:[#allocation0]]
  $region62: #{tpu_custom_call.1} parent=0
    _
  %s16 = ssub.s32 1, %s14
  %s17 = scalar_select 0, %s16, %s14
  %v18 = vstv %s12
  %19 = vst [vmem:[#allocation2] sm:$0x1] %v18
  $region1: #{tpu_custom_call.1} parent=0
    #allocation3 [shape = 'u8[512]{0}', space=vmem, size = 0x400, scoped, tag = 'output window, operand 0, single buffered']
    #allocation4 [shape = 's32[1]{0}', space=sflag, size = 0x4, scoped, tag = 'scoped memory for tpu_custom_call.1']
    %20 = vsyncpa [#allocation4], 0
    // Predicated region
    $region2: #{tpu_custom_call.1} parent=1 // pred_check
      _
    $region3: #{tpu_custom_call.1} parent=1 // pred_check_branch
      %22 = sbr.rel (0) target = $region5
    $region4: #{tpu_custom_call.1} parent=1 // pred_region
      _
    $region5: #{tpu_custom_call.1} parent=1 // pred_fallthru
      _
    // Predicated region
    $region6: #{tpu_custom_call.1} parent=1 // pred_check
      _
    $region7: #{tpu_custom_call.1} parent=1 // pred_check_branch
      %24 = sbr.rel (0) target = $region9
    $region8: #{tpu_custom_call.1} parent=1 // pred_region
      _
    $region9: #{tpu_custom_call.1} parent=1 // pred_fallthru
      _
    // Predicated region
    $region10: #{tpu_custom_call.1} parent=1 // pred_check
      _
    $region11: #{tpu_custom_call.1} parent=1 // pred_check_branch
      %26 = sbr.rel (0) target = $region13
    $region12: #{tpu_custom_call.1} parent=1 // pred_region
      _
    $region13: #{tpu_custom_call.1} parent=1 // pred_fallthru
      _
    // Predicated region
    $region14: #{tpu_custom_call.1} parent=1 // pred_check
      _
    $region15: #{tpu_custom_call.1} parent=1 // pred_check_branch
      %28 = sbr.rel (0) target = $region17
    $region16: #{tpu_custom_call.1} parent=1 // pred_region
      _
    $region17: #{tpu_custom_call.1} parent=1 // pred_fallthru
      _
    // Predicated region
    $region18: #{tpu_custom_call.1} parent=1 // pred_check
      _
    $region19: #{tpu_custom_call.1} parent=1 // pred_check_branch
      %30 = sbr.rel (0) target = $region21
    $region20: #{tpu_custom_call.1} parent=1 // pred_region
      _
    $region21: #{tpu_custom_call.1} parent=1 // pred_fallthru
      _
    // Predicated region
    $region22: #{tpu_custom_call.1} parent=1 // pred_check
      _
    $region23: #{tpu_custom_call.1} parent=1 // pred_check_branch
      %32 = sbr.rel (0) target = $region25
    $region24: #{tpu_custom_call.1} parent=1 // pred_region
      _
    $region25: #{tpu_custom_call.1} parent=1 // pred_fallthru
      _
    // Predicated region
    $region26: #{tpu_custom_call.1} parent=1 // pred_check
      _
    $region27: #{tpu_custom_call.1} parent=1 // pred_check_branch
      %34 = sbr.rel (0) target = $region29
    $region28: #{tpu_custom_call.1} parent=1 // pred_region
      _
    $region29: #{tpu_custom_call.1} parent=1 // pred_fallthru
      _
    // Predicated region
    $region30: #{tpu_custom_call.1} parent=1 // pred_check
      _
    $region31: #{tpu_custom_call.1} parent=1 // pred_check_branch
      %36 = sbr.rel (0) target = $region33
    $region32: #{tpu_custom_call.1} parent=1 // pred_region
      _
    $region33: #{tpu_custom_call.1} parent=1 // pred_fallthru
      _
    // Predicated region
    $region34: #{tpu_custom_call.1} parent=1 // pred_check
      _
    $region35: #{tpu_custom_call.1} parent=1 // pred_check_branch
      %38 = sbr.rel (0) target = $region37
    $region36: #{tpu_custom_call.1} parent=1 // pred_region
      _
    $region37: #{tpu_custom_call.1} parent=1 // pred_fallthru
      _
    // Predicated region
    $region38: #{tpu_custom_call.1} parent=1 // pred_check
      _
    $region39: #{tpu_custom_call.1} parent=1 // pred_check_branch
      %40 = sbr.rel (0) target = $region41
    $region40: #{tpu_custom_call.1} parent=1 // pred_region
      _
    $region41: #{tpu_custom_call.1} parent=1 // pred_fallthru
      _
    // Predicated region
    $region42: #{tpu_custom_call.1} parent=1 // pred_check
      _
    $region43: #{tpu_custom_call.1} parent=1 // pred_check_branch
      %42 = sbr.rel (0) target = $region45
    $region44: #{tpu_custom_call.1} parent=1 // pred_region
      _
    $region45: #{tpu_custom_call.1} parent=1 // pred_fallthru
      _
    // Predicated region
    $region46: #{tpu_custom_call.1} parent=1 // pred_check
      _
    $region47: #{tpu_custom_call.1} parent=1 // pred_check_branch
      %44 = sbr.rel (0) target = $region49
    $region48: #{tpu_custom_call.1} parent=1 // pred_region
      _
    $region49: #{tpu_custom_call.1} parent=1 // pred_fallthru
      _
    // Predicated region
    $region50: #{tpu_custom_call.1} parent=1 // pred_check
      _
    $region51: #{tpu_custom_call.1} parent=1 // pred_check_branch
      %46 = sbr.rel (0) target = $region53
    $region52: #{tpu_custom_call.1} parent=1 // pred_region
      _
    $region53: #{tpu_custom_call.1} parent=1 // pred_fallthru
      _
    %v47 = vld [vmem:[%s0] sm:$0xff]
    %v48 = vld [vmem:[%s0 + $0x8] sm:$0xff]
    %v49 = vld [vmem:[%s1] sm:$0x1]
    %v50 = vld [vmem:[%s2] sm:$0x1]
    %v52 = vlaneseq
    %v53 = vshrl.u32 %v52, 7
    %v54 = vsub.s32 0, %v53
    %v55 = vrot.slane %v49, %v54
    %v57 = vmul.f32 %v47, %v55
    %v58 = vmul.f32 %v48, %v55
    %vm59 = vcmask 752640
    %v60 = vsel %vm59, %v57, 0.0
    %61 = vadd.xlane.f32.xlu0 %v60
    %v62 = vpop.xlane.xlu0 %61
    %v63 = vsel %vm59, %v58, 0.0
    %64 = vadd.xlane.f32.xlu0 %v63
    %v65 = vpop.xlane.xlu0 %64
    %v67 = vlaneseq
    %v68 = vshrl.u32 %v67, 7
    %v69 = vsub.s32 0, %v68
    %v70 = vrot.slane %v50, %v69
    %v72 = vmul.f32 %v47, %v70
    %v73 = vmul.f32 %v48, %v70
    %v74 = vsel %vm59, %v72, 0.0
    %75 = vadd.xlane.f32.xlu0 %v74
    %v76 = vpop.xlane.xlu0 %75
    %v77 = vsel %vm59, %v73, 0.0
    %78 = vadd.xlane.f32.xlu0 %v77
    %v79 = vpop.xlane.xlu0 %78
    %v80 = vrcp.pop %v62
    %v81 = vmul.f32 %v76, %v80
    %v82 = vrcp.pop %v65
    %v83 = vmul.f32 %v79, %v82
    %v84 = vmul.f32 %v81, %v55
    %v85 = vmul.f32 %v83, %v55
    %v86 = vsub.f32 %v72, %v84
    %v87 = vsub.f32 %v73, %v85
    %v88 = vmul.f32 %v86, %v86
    %v89 = vmul.f32 %v87, %v87
    %v90 = vsel %vm59, %v88, 0.0
    %91 = vadd.xlane.f32.xlu0 %v90
    %v92 = vpop.xlane.xlu0 %91
    %v93 = vsel %vm59, %v89, 0.0
    %94 = vadd.xlane.f32.xlu0 %v93
    %v95 = vpop.xlane.xlu0 %94
    %v96 = vrsqrt.pop %v92
    %v97 = vmul.f32 %v92, %v96
    %vm98 = vcmp.eq.f32.partialorder %v92, inf
    %v99 = vsel %vm98, %v92, %v97
    %vm100 = vcmp.eq.f32.partialorder %v92, 0.0
    %v101 = vand.u32 %v92, 2147483648
    %v102 = vsel %vm100, %v101, %v99
    %v103 = vrsqrt.pop %v95
    %v104 = vmul.f32 %v95, %v103
    %vm105 = vcmp.eq.f32.partialorder %v95, inf
    %v106 = vsel %vm105, %v95, %v104
    %vm107 = vcmp.eq.f32.partialorder %v95, 0.0
    %v108 = vand.u32 %v95, 2147483648
    %v109 = vsel %vm107, %v108, %v106
    %v110 = vmul.f32 %v102, %v80
    %v111 = vmul.f32 %v109, %v82
    %v112 = vld [vmem:[%s3] sm:$0xff]
    %v113 = vld [vmem:[%s3 + $0x8] sm:$0xff]
    %v114 = vld [vmem:[%s3 + $0x10] sm:$0xff]
    %v115 = vld [vmem:[%s3 + $0x18] sm:$0xff]
    %v116 = vld [vmem:[%s3 + $0x20] sm:$0xff]
    %v117 = vld [vmem:[%s3 + $0x28] sm:$0xff]
    %v118 = vld [vmem:[%s3 + $0x30] sm:$0xff]
    %v119 = vld [vmem:[%s3 + $0x38] sm:$0xff]
    %v120 = vld [vmem:[%s3 + $0x40] sm:$0xff]
    %v121 = vld [vmem:[%s3 + $0x48] sm:$0xff]
    %v122 = vld [vmem:[%s3 + $0x50] sm:$0xff]
    %v123 = vld [vmem:[%s3 + $0x58] sm:$0xf]
    %v124 = vld [vmem:[%s4] sm:$0x1]
    %v126 = vlaneseq
    %v127 = vshrl.u32 %v126, 7
    %v128 = vsub.s32 0, %v127
    %v129 = vrot.slane %v124, %v128
    %v131 = vmul.f32 %v62, %v129
    %v132 = vmul.f32 %v65, %v129
    %v134 = vsel %vm59, %v47, 0
    %v137 = vsel %vm59, %v48, 0
    %vm139 = vcmask 1043456
    %v141 = vsel %vm139, %v123, 0
    %143 = vmatprep.subr.mxu0 0.0
    %144 = vmatpush1.msra.mxu0 %v112
    %145 = vmatprep.subr.mxu0 0.0
    %146 = vmatpush1.msra.mxu0 %v113
    %147 = vmatprep.subr.mxu0 0.0
    %148 = vmatpush1.msra.mxu0 %v114
    %149 = vmatprep.subr.mxu0 0.0
    %150 = vmatpush1.msra.mxu0 %v115
    %151 = vmatprep.subr.mxu0 0.0
    %152 = vmatpush1.msra.mxu0 %v116
    %153 = vmatprep.subr.mxu0 0.0
    %154 = vmatpush1.msra.mxu0 %v117
    %155 = vmatprep.subr.mxu0 0.0
    %156 = vmatpush1.msra.mxu0 %v118
    %157 = vmatprep.subr.mxu0 0.0
    %158 = vmatpush1.msra.mxu0 %v119
    %159 = vmatprep.subr.mxu0 0.0
    %160 = vmatpush1.msra.mxu0 %v120
    %161 = vmatprep.subr.mxu0 0.0
    %162 = vmatpush1.msra.mxu0 %v121
    %163 = vmatprep.subr.mxu0 0.0
    %164 = vmatpush1.msra.mxu0 %v122
    %165 = vmatprep.subr.mxu0 0.0
    %166 = vmatpush1.msra.mxu0 %v141
    %167 = vmatprep.subr.mxu0 0.0
    %168 = vmatpush1.msra.mxu0 0.0
    %169 = vmatprep.subr.mxu0 0.0
    %170 = vmatpush1.msra.mxu0 0.0
    %171 = vmatprep.subr.mxu0 0.0
    %172 = vmatpush1.msra.mxu0 0.0
    %173 = vmatprep.subr.mxu0 0.0
    %174 = vmatpush1.msra.mxu0 0.0
    %175 = vmatprep.subr.mxu0 0.0
    %176 = vmatpush1.msra.mxu0 0.0
    %177 = vmatprep.subr.mxu0 0.0
    %178 = vmatpush1.msra.mxu0 0.0
    %179 = vmatprep.subr.mxu0 0.0
    %180 = vmatpush1.msra.mxu0 0.0
    %181 = vmatprep.subr.mxu0 0.0
    %182 = vmatpush1.msra.mxu0 0.0
    %183 = vmatprep.subr.mxu0 0.0
    %184 = vmatpush1.msra.mxu0 0.0
    %185 = vmatprep.subr.mxu0 0.0
    %186 = vmatpush1.msra.mxu0 0.0
    %187 = vmatprep.subr.mxu0 0.0
    %188 = vmatpush1.msra.mxu0 0.0
    %189 = vmatprep.subr.mxu0 0.0
    %190 = vmatpush1.msra.mxu0 0.0
    %191 = vmatprep.subr.mxu0 0.0
    %192 = vmatpush1.msra.mxu0 0.0
    %193 = vmatprep.subr.mxu0 0.0
    %194 = vmatpush1.msra.mxu0 0.0
    %195 = vmatprep.subr.mxu0 0.0
    %196 = vmatpush1.msra.mxu0 0.0
    %197 = vmatprep.subr.mxu0 0.0
    %198 = vmatpush1.msra.mxu0 0.0
    %199 = vmatprep.subr.mxu0 0.0
    %200 = vmatpush1.msra.mxu0 0.0
    %201 = vmatprep.subr.mxu0 0.0
    %202 = vmatpush1.msra.mxu0 0.0
    %203 = vmatprep.subr.mxu0 0.0
    %204 = vmatpush1.msra.mxu0 0.0
    %205 = vmatprep.subr.mxu0 0.0
    %206 = vmatpush1.msra.mxu0 0.0
    %207 = vmatprep.mubr.f32.mxu0 0.0
    %208 = vmatmul.mubr.f32.gmra.mrb[0].mxu0 %v134
    %v209 = vpop.f32.mrb[0].mxu0
    %v210 = vadd.f32 %v131, %v209
    %v211 = vpop.f32.mrb[0].mxu0
    %212 = vmatprep.mubr.f32.mxu0 0.0
    %213 = vmatmul.mubr.f32.gmra.mrb[0].mxu0 %v137
    %v214 = vpop.f32.mrb[0].mxu0
    %v215 = vadd.f32 %v132, %v214
    %v216 = vpop.f32.mrb[0].mxu0
    %217 = vdwg.mxu0
    %v218 = vld [vmem:[%s5] sm:$0x1]
    %v220 = vlaneseq
    %v221 = vshrl.u32 %v220, 7
    %v222 = vsub.s32 0, %v221
    %v223 = vrot.slane %v218, %v222
    %v225 = vmul.f32 %v81, %v223
    %v226 = vmul.f32 %v83, %v223
    %v227 = vadd.f32 %v210, %v225
    %v228 = vadd.f32 %v215, %v226
    %v229 = vld [vmem:[%s6] sm:$0x1]
    %v231 = vlaneseq
    %v232 = vshrl.u32 %v231, 7
    %v233 = vsub.s32 0, %v232
    %v234 = vrot.slane %v229, %v233
    %v236 = vmul.f32 %v110, %v234
    %v237 = vmul.f32 %v111, %v234
    %v238 = vadd.f32 %v227, %v236
    %v239 = vadd.f32 %v228, %v237
    %v240 = vld [vmem:[%s7] sm:$0x1]
    %v242 = vlaneseq
    %v243 = vshrl.u32 %v242, 7
    %v244 = vsub.s32 0, %v243
    %v245 = vrot.slane %v240, %v244
    %v247 = vadd.f32 %v238, %v245
    %v248 = vadd.f32 %v239, %v245
    %vm249 = vcmp.gt.f32.partialorder %v247, 0.0
    %vm250 = vcmp.gt.f32.partialorder %v248, 0.0
    %v251 = vmin.f32 %v247, 0.0
    %v252 = vmin.f32 %v248, 0.0
    %v253 = vmul.f32 %v251, 1.442695
    %v254 = vpow.pop %v253
    %v255 = vmul.f32 %v252, 1.442695
    %v256 = vpow.pop %v255
    %v257 = vsub.f32 %v254, 1.0
    %v258 = vsub.f32 %v256, 1.0
    %v259 = vsel %vm249, %v247, %v257
    %v260 = vsel %vm250, %v248, %v258
    %v261 = vld [vmem:[%s8] sm:$0xff]
    %v262 = vld [vmem:[%s8 + $0x8] sm:$0xff]
    %v263 = vmul.f32 %v259, %v261
    %v264 = vmul.f32 %v260, %v262
    %v265 = vld [vmem:[%s9] sm:$0xff]
    %v266 = vld [vmem:[%s9 + $0x8] sm:$0xff]
    %v267 = vld [vmem:[%s9 + $0x10] sm:$0xff]
    %v268 = vld [vmem:[%s9 + $0x18] sm:$0xff]
    %v269 = vld [vmem:[%s10] sm:$0x1]
    %v271 = vlaneseq
    %v272 = vshrl.u32 %v271, 7
    %v273 = vsub.s32 0, %v272
    %v274 = vrot.slane %v269, %v273
    %vm276 = vcmask 261120
    %v278 = vsel %vm276, %v263, 0
    %v281 = vsel %vm276, %v264, 0
    %283 = vmatprep.subr.mxu0 0.0
    %284 = vmatpush1.msra.mxu0 %v265
    %285 = vmatprep.subr.mxu0 0.0
    %286 = vmatpush1.msra.mxu0 %v266
    %287 = vmatprep.subr.mxu0 0.0
    %288 = vmatpush1.msra.mxu0 %v267
    %289 = vmatprep.subr.mxu0 0.0
    %290 = vmatpush1.msra.mxu0 %v268
    %291 = vmatprep.subr.mxu0 0.0
    %292 = vmatpush1.msra.mxu0 0.0
    %293 = vmatprep.subr.mxu0 0.0
    %294 = vmatpush1.msra.mxu0 0.0
    %295 = vmatprep.subr.mxu0 0.0
    %296 = vmatpush1.msra.mxu0 0.0
    %297 = vmatprep.subr.mxu0 0.0
    %298 = vmatpush1.msra.mxu0 0.0
    %299 = vmatprep.subr.mxu0 0.0
    %300 = vmatpush1.msra.mxu0 0.0
    %301 = vmatprep.subr.mxu0 0.0
    %302 = vmatpush1.msra.mxu0 0.0
    %303 = vmatprep.subr.mxu0 0.0
    %304 = vmatpush1.msra.mxu0 0.0
    %305 = vmatprep.subr.mxu0 0.0
    %306 = vmatpush1.msra.mxu0 0.0
    %307 = vmatprep.subr.mxu0 0.0
    %308 = vmatpush1.msra.mxu0 0.0
    %309 = vmatprep.subr.mxu0 0.0
    %310 = vmatpush1.msra.mxu0 0.0
    %311 = vmatprep.subr.mxu0 0.0
    %312 = vmatpush1.msra.mxu0 0.0
    %313 = vmatprep.subr.mxu0 0.0
    %314 = vmatpush1.msra.mxu0 0.0
    %315 = vmatprep.subr.mxu0 0.0
    %316 = vmatpush1.msra.mxu0 0.0
    %317 = vmatprep.subr.mxu0 0.0
    %318 = vmatpush1.msra.mxu0 0.0
    %319 = vmatprep.subr.mxu0 0.0
    %320 = vmatpush1.msra.mxu0 0.0
    %321 = vmatprep.subr.mxu0 0.0
    %322 = vmatpush1.msra.mxu0 0.0
    %323 = vmatprep.subr.mxu0 0.0
    %324 = vmatpush1.msra.mxu0 0.0
    %325 = vmatprep.subr.mxu0 0.0
    %326 = vmatpush1.msra.mxu0 0.0
    %327 = vmatprep.subr.mxu0 0.0
    %328 = vmatpush1.msra.mxu0 0.0
    %329 = vmatprep.subr.mxu0 0.0
    %330 = vmatpush1.msra.mxu0 0.0
    %331 = vmatprep.subr.mxu0 0.0
    %332 = vmatpush1.msra.mxu0 0.0
    %333 = vmatprep.subr.mxu0 0.0
    %334 = vmatpush1.msra.mxu0 0.0
    %335 = vmatprep.subr.mxu0 0.0
    %336 = vmatpush1.msra.mxu0 0.0
    %337 = vmatprep.subr.mxu0 0.0
    %338 = vmatpush1.msra.mxu0 0.0
    %339 = vmatprep.subr.mxu0 0.0
    %340 = vmatpush1.msra.mxu0 0.0
    %341 = vmatprep.subr.mxu0 0.0
    %342 = vmatpush1.msra.mxu0 0.0
    %343 = vmatprep.subr.mxu0 0.0
    %344 = vmatpush1.msra.mxu0 0.0
    %345 = vmatprep.subr.mxu0 0.0
    %346 = vmatpush1.msra.mxu0 0.0
    %347 = vmatprep.mubr.f32.mxu0 0.0
    %348 = vmatmul.mubr.f32.gmra.mrb[0].mxu0 %v278
    %v349 = vpop.f32.mrb[0].mxu0
    %v350 = vadd.f32 %v274, %v349
    %v351 = vpop.f32.mrb[0].mxu0
    %352 = vmatprep.mubr.f32.mxu0 0.0
    %353 = vmatmul.mubr.f32.gmra.mrb[0].mxu0 %v281
    %v354 = vpop.f32.mrb[0].mxu0
    %v355 = vadd.f32 %v274, %v354
    %v356 = vpop.f32.mrb[0].mxu0
    %357 = vdwg.mxu0
    %vm358 = vcmp.gt.f32.partialorder %v350, 0.0
    %vm359 = vcmp.gt.f32.partialorder %v355, 0.0
    %v360 = vmin.f32 %v350, 0.0
    %v361 = vmin.f32 %v355, 0.0
    %v362 = vmul.f32 %v360, 1.442695
    %v363 = vpow.pop %v362
    %v364 = vmul.f32 %v361, 1.442695
    %v365 = vpow.pop %v364
    %v366 = vsub.f32 %v363, 1.0
    %v367 = vsub.f32 %v365, 1.0
    %v368 = vsel %vm358, %v350, %v366
    %v369 = vsel %vm359, %v355, %v367
    %v370 = vld [vmem:[%s11] sm:$0x1]
    %v371 = vld [vmem:[#allocation2] sm:$0x1]
    %373 = vset.pattern.permute.xlu0 0
    %374 = vperm.xlu0 %373, %v371
    %v375 = vpop.permute.xlu0 %374
    %v377 = vlaneseq
    %v378 = vshrl.u32 %v377, 7
    %v379 = vsub.s32 0, %v378
    %v380 = vrot.slane %v375, %v379
    %v382 = vsel %vm276, %v370, 0
    %v385 = vsel %vm276, %v368, 0
    %v388 = vsel %vm276, %v369, 0
    %390 = vmatprep.subr.mxu0 0.0
    %391 = vmatpush1.xpose.msra.mxu0 %v385
    %392 = vmatprep.subr.mxu0 0.0
    %393 = vmatpush1.xpose.msra.mxu0 %v388
    %394 = vmatprep.subr.mxu0 0.0
    %395 = vmatpush1.xpose.msra.mxu0 0.0
    %396 = vmatprep.subr.mxu0 0.0
    %397 = vmatpush1.xpose.msra.mxu0 0.0
    %398 = vmatprep.subr.mxu0 0.0
    %399 = vmatpush1.xpose.msra.mxu0 0.0
    %400 = vmatprep.subr.mxu0 0.0
    %401 = vmatpush1.xpose.msra.mxu0 0.0
    %402 = vmatprep.subr.mxu0 0.0
    %403 = vmatpush1.xpose.msra.mxu0 0.0
    %404 = vmatprep.subr.mxu0 0.0
    %405 = vmatpush1.xpose.msra.mxu0 0.0
    %406 = vmatprep.subr.mxu0 0.0
    %407 = vmatpush1.xpose.msra.mxu0 0.0
    %408 = vmatprep.subr.mxu0 0.0
    %409 = vmatpush1.xpose.msra.mxu0 0.0
    %410 = vmatprep.subr.mxu0 0.0
    %411 = vmatpush1.xpose.msra.mxu0 0.0
    %412 = vmatprep.subr.mxu0 0.0
    %413 = vmatpush1.xpose.msra.mxu0 0.0
    %414 = vmatprep.subr.mxu0 0.0
    %415 = vmatpush1.xpose.msra.mxu0 0.0
    %416 = vmatprep.subr.mxu0 0.0
    %417 = vmatpush1.xpose.msra.mxu0 0.0
    %418 = vmatprep.subr.mxu0 0.0
    %419 = vmatpush1.xpose.msra.mxu0 0.0
    %420 = vmatprep.subr.mxu0 0.0
    %421 = vmatpush1.xpose.msra.mxu0 0.0
    %422 = vmatprep.subr.mxu0 0.0
    %423 = vmatpush1.xpose.msra.mxu0 0.0
    %424 = vmatprep.subr.mxu0 0.0
    %425 = vmatpush1.xpose.msra.mxu0 0.0
    %426 = vmatprep.subr.mxu0 0.0
    %427 = vmatpush1.xpose.msra.mxu0 0.0
    %428 = vmatprep.subr.mxu0 0.0
    %429 = vmatpush1.xpose.msra.mxu0 0.0
    %430 = vmatprep.subr.mxu0 0.0
    %431 = vmatpush1.xpose.msra.mxu0 0.0
    %432 = vmatprep.subr.mxu0 0.0
    %433 = vmatpush1.xpose.msra.mxu0 0.0
    %434 = vmatprep.subr.mxu0 0.0
    %435 = vmatpush1.xpose.msra.mxu0 0.0
    %436 = vmatprep.subr.mxu0 0.0
    %437 = vmatpush1.xpose.msra.mxu0 0.0
    %438 = vmatprep.subr.mxu0 0.0
    %439 = vmatpush1.xpose.msra.mxu0 0.0
    %440 = vmatprep.subr.mxu0 0.0
    %441 = vmatpush1.xpose.msra.mxu0 0.0
    %442 = vmatprep.subr.mxu0 0.0
    %443 = vmatpush1.xpose.msra.mxu0 0.0
    %444 = vmatprep.subr.mxu0 0.0
    %445 = vmatpush1.xpose.msra.mxu0 0.0
    %446 = vmatprep.subr.mxu0 0.0
    %447 = vmatpush1.xpose.msra.mxu0 0.0
    %448 = vmatprep.subr.mxu0 0.0
    %449 = vmatpush1.xpose.msra.mxu0 0.0
    %450 = vmatprep.subr.mxu0 0.0
    %451 = vmatpush1.xpose.msra.mxu0 0.0
    %452 = vmatprep.subr.mxu0 0.0
    %453 = vmatpush1.xpose.msra.mxu0 0.0
    %454 = vmatprep.mubr.f32.mxu0 0.0
    %455 = vmatmul.mubr.f32.gmra.mrb[0].mxu0 %v382
    %v456 = vpop.f32.mrb[0].mxu0
    %v457 = vadd.f32 %v380, %v456
    %v458 = vpop.f32.mrb[0].mxu0
    %459 = vdwg.mxu0
    %v460 = vsub.f32 0.0, %v457
    %v461 = vmul.f32 %v460, 1.442695
    %v462 = vpow.pop %v461
    %v463 = vadd.f32 %v462, 1.0
    %v464 = vrcp.pop %v463
    %v465 = vmul.f32 1.0, %v464
    %vm466 = vcmask 122880
    %467 = vst.msk [vmem:[#allocation3] sm:$0x1] %vm466, %v465
    // Predicated region
    $region54: #{tpu_custom_call.1} parent=1 // pred_check
      _
    $region55: #{tpu_custom_call.1} parent=1 // pred_check_branch
      %469 = sbr.rel (0) target = $region57
    $region56: #{tpu_custom_call.1} parent=1 // pred_region
      %s471 = ssub.s32 16, 16
      %472 = vsyncadd [#allocation4], %s471
      %s474 = sshll.u32 [#allocation3], 4
      %s475 = int_to_ptr.vmem [resolvable:$true] %s474
      %477 = dma.vmem_to_hbm [thread:$0]  %s475, 16, %s13, [#allocation4]
    $region57: #{tpu_custom_call.1} parent=1 // pred_fallthru
      _
    // Predicated region
    $region58: #{tpu_custom_call.1} parent=1 // pred_check
      _
    $region59: #{tpu_custom_call.1} parent=1 // pred_check_branch
      %479 = sbr.rel (0) target = $region61
    $region60: #{tpu_custom_call.1} parent=1 // pred_region
      %480 = dma.done [#allocation4], 16
    $region61: #{tpu_custom_call.1} parent=1 // pred_fallthru
      _
    %481 = vsyncpa [#allocation4], 1

</llo_original>
